<compile_context>
chip_gen: v7x
topology: tpu7x:2x2x1
jax: 0.10.0
libtpu: 0.0.40
codegen_flags: <defaults>
</compile_context>

<pallas_src>
import jax
import jax.numpy as jnp
from jax.experimental import pallas as pl
from jax.experimental.pallas import tpu as pltpu


def convmixer_kernel(x_ref, w1_ref, b1_ref, w2_ref, b2_ref, w3_ref, b3_ref,
                     o_ref, h1_ref):
    """Grid = (batch-tile index g,).

    x_ref  : (TB, depth, rank)   input slab for this batch tile
    w1_ref : (C, depth)          conv1 weights
    b1_ref : (C, 1)              conv1 bias
    w2_ref : (C, rank, C)        conv2 weights, (c_in, w, c_out) layout
    b2_ref : (1, C)              conv2 bias
    w3_ref : (C, rank)           linear weight, pre-transposed
    b3_ref : (1, rank)           linear bias
    o_ref  : (TB, rank)          lane-dense output slab
    h1_ref : (TB, C, rank) f32   conv1 activation scratch (VMEM)
    """
    tb = x_ref.shape[0]
    C = w1_ref.shape[0]

    # ---- conv1 on the MXU: h1[b,c,w] = relu(b1[c] + sum_d W1[c,d] x[b,d,w]).
    # One pass over the x tile; batched matmul (flash-attention style einsum).
    w1b = jnp.broadcast_to(w1_ref[...][None], (tb,) + w1_ref.shape)   # (TB, C, depth)
    h1 = jnp.einsum("bcd,bdw->bcw", w1b, x_ref[...],
                    preferred_element_type=jnp.float32)               # (TB, C, rank)
    h1_ref[...] = jnp.maximum(h1 + b1_ref[...][None], 0.0)

    # ---- conv2: acc[b,o] = sum_c  h1[b,c,:] @ W2p[c]   (C MXU matmuls, K=rank)
    acc = jnp.dot(h1_ref[:, 0, :], w2_ref[0],
                  preferred_element_type=jnp.float32)                 # (TB, C)
    for c in range(1, C):
        acc = acc + jnp.dot(h1_ref[:, c, :], w2_ref[c],
                            preferred_element_type=jnp.float32)
    h2 = jnp.maximum(acc + b2_ref[...], 0.0)                          # (TB, C)

    # ---- linear head fused in the same step: lane-dense (TB, rank) store.
    out = jnp.dot(h2, w3_ref[...], preferred_element_type=jnp.float32)
    o_ref[...] = (out + b3_ref[...]).astype(o_ref.dtype)


def _vmem_bytes(tb, depth, rank, C, in_itemsize, out_itemsize):
    """Rough per-call VMEM footprint: double-buffered x/out blocks, whole
    (double-buffered) weights, the h1 scratch and small temporaries."""
    weight_elems = C * depth + C + C * rank * C + C + C * rank + rank
    return (2 * tb * depth * rank * in_itemsize       # x blocks (double-buffered)
            + 2 * tb * rank * out_itemsize            # output blocks
            + tb * C * rank * 4                       # h1 scratch (f32)
            + 4 * tb * (2 * C + rank)                 # acc / h2 / out temporaries
            + 2 * 4 * weight_elems)                   # resident weights


def _pick_batch_tile(batch, depth, rank, C, in_itemsize, out_itemsize,
                     target=256, vmem_budget=40 * 2**20):
    """Largest tile TB dividing `batch` with TB % 8 == 0 (or TB == batch) that
    fits the VMEM budget; prefer >= 2 grid steps so both v7x TensorCores get
    work via the 'parallel' batch axis."""
    legal = [tb for tb in range(1, batch + 1)
             if batch % tb == 0 and (tb % 8 == 0 or tb == batch)]
    fits = [tb for tb in legal
            if tb <= target
            and _vmem_bytes(tb, depth, rank, C, in_itemsize, out_itemsize) <= vmem_budget]
    if not fits:
        fits = [min(legal)]
    multi = [tb for tb in fits if batch // tb >= 2]
    pool = multi if multi else fits
    return max(pool)


def convmixer_forward(x, w1_conv, b1, w2_conv, b2, w3, b3, *, batch_tile=256):
    """x: (B, depth, rank); torch-shaped parameters:
         conv1 weight (C, 1, depth, 1), bias (C,)   with C = rank // 4
         conv2 weight (C, C, 1, rank),  bias (C,)
         linear weight (rank, C),       bias (rank,)
       Returns (B, rank)."""
    B, depth, rank = x.shape
    C = w1_conv.shape[0]
    assert w1_conv.shape == (C, 1, depth, 1)
    assert w2_conv.shape == (C, C, 1, rank)
    assert w3.shape == (rank, C)

    out_itemsize = x.dtype.itemsize
    tb = _pick_batch_tile(B, depth, rank, C, x.dtype.itemsize, out_itemsize,
                          target=batch_tile)
    grid = (B // tb,)

    # Wrapper-side layout plumbing (free): no transposes/reshapes in-kernel.
    w1e = w1_conv.reshape(C, depth).astype(jnp.float32)              # (C, depth)
    b1e = b1.reshape(C, 1).astype(jnp.float32)                        # (C, 1)
    w2p = jnp.transpose(w2_conv[:, :, 0, :], (1, 2, 0)).astype(jnp.float32)  # (C_in, rank, C_out)
    b2e = b2.reshape(1, C).astype(jnp.float32)                        # (1, C)
    w3t = w3.T.astype(jnp.float32)                                    # (C, rank)
    b3e = b3.reshape(1, rank).astype(jnp.float32)                     # (1, rank)

    flops = 2 * B * C * rank * (depth + C + 1)
    bytes_accessed = int(
        x.dtype.itemsize * x.size + out_itemsize * B * rank
        + 4 * (w1e.size + b1e.size + w2p.size + b2e.size + w3t.size + b3e.size))

    est_vmem = _vmem_bytes(tb, depth, rank, C, x.dtype.itemsize, out_itemsize)
    vmem_limit = int(min(max(est_vmem * 5 // 4, 32 * 2**20), 60 * 2**20))

    grid_spec = pltpu.PrefetchScalarGridSpec(
        num_scalar_prefetch=0,
        grid=grid,
        in_specs=[
            pl.BlockSpec((tb, depth, rank), lambda g: (g, 0, 0)),  # x (one fetch per tile)
            pl.BlockSpec((C, depth),        lambda g: (0, 0)),     # conv1 weight (whole)
            pl.BlockSpec((C, 1),            lambda g: (0, 0)),     # conv1 bias   (whole)
            pl.BlockSpec((C, rank, C),      lambda g: (0, 0, 0)),  # conv2 weight (whole)
            pl.BlockSpec((1, C),            lambda g: (0, 0)),     # conv2 bias
            pl.BlockSpec((C, rank),         lambda g: (0, 0)),     # linear weight (pre-T)
            pl.BlockSpec((1, rank),         lambda g: (0, 0)),     # linear bias
        ],
        out_specs=pl.BlockSpec((tb, rank), lambda g: (g, 0)),      # lane-dense output
        scratch_shapes=[pltpu.VMEM((tb, C, rank), jnp.float32)],   # h1 staging
    )

    return pl.pallas_call(
        convmixer_kernel,
        out_shape=jax.ShapeDtypeStruct((B, rank), x.dtype),
        grid_spec=grid_spec,
        compiler_params=pltpu.CompilerParams(
            dimension_semantics=("parallel",),
            vmem_limit_bytes=vmem_limit),
        cost_estimate=pl.CostEstimate(
            flops=flops, transcendentals=0, bytes_accessed=bytes_accessed),
    )(x, w1e, b1e, w2p, b2e, w3t, b3e)


def convmixer_ref(x, w1_conv, b1, w2_conv, b2, w3, b3):
    """Pure-JAX replica of the PyTorch ConvMixer.forward (no Pallas)."""
    B, depth, rank = x.shape
    C = w1_conv.shape[0]
    w1m = w1_conv.reshape(C, depth)                        # W1[c, d]
    h1 = jax.nn.relu(jnp.einsum("cd,bdr->bcr", w1m, x) + b1[None, :, None])
    w2m = w2_conv.reshape(C, C * rank)                     # row o, flat (c, w)
    h2 = jax.nn.relu(h1.reshape(B, C * rank) @ w2m.T + b2[None, :])
    return h2 @ w3.T + b3[None, :]


if __name__ == "__main__":
    B, depth, rank = 2, 8, 32          # C = rank // 4 = 8
    C = rank // 4
    key = jax.random.PRNGKey(0)
    kx, k1, k2, k3, k4, k5, k6 = jax.random.split(key, 7)

    x = jax.random.normal(kx, (B, depth, rank), dtype=jnp.float32)
    w1 = 0.20 * jax.random.normal(k1, (C, 1, depth, 1), dtype=jnp.float32)
    b1 = 0.10 * jax.random.normal(k2, (C,), dtype=jnp.float32)
    w2 = 0.05 * jax.random.normal(k3, (C, C, 1, rank), dtype=jnp.float32)
    b2 = 0.10 * jax.random.normal(k4, (C,), dtype=jnp.float32)
    w3 = 0.20 * jax.random.normal(k5, (rank, C), dtype=jnp.float32)
    b3 = 0.10 * jax.random.normal(k6, (rank,), dtype=jnp.float32)

    out = convmixer_forward(x, w1, b1, w2, b2, w3, b3)
    out = jax.block_until_ready(out)

    ref = convmixer_ref(x, w1, b1, w2, b2, w3, b3)
    assert out.shape == (B, rank)
    assert jnp.allclose(out, ref, atol=1e-3, rtol=1e-3), (
        f"mismatch vs reference: max abs err = {jnp.max(jnp.abs(out - ref))}")
    print("KERNEL_OK")
</pallas_src>

<mosaic_0001>
module attributes {stable_mosaic.version = 11 : i64} {
  func.func @convmixer_kernel(%arg0: i32, %arg1: memref<2x8x32xf32, #tpu.memory_space<vmem>>, %arg2: memref<8x8xf32, #tpu.memory_space<vmem>>, %arg3: memref<8x1xf32, #tpu.memory_space<vmem>>, %arg4: memref<8x32x8xf32, #tpu.memory_space<vmem>>, %arg5: memref<1x8xf32, #tpu.memory_space<vmem>>, %arg6: memref<8x32xf32, #tpu.memory_space<vmem>>, %arg7: memref<1x32xf32, #tpu.memory_space<vmem>>, %arg8: memref<2x32xf32, #tpu.memory_space<vmem>>, %arg9: memref<2x8x32xf32, #tpu.memory_space<vmem>>) attributes {dimension_semantics = [#tpu.dimension_semantics<parallel>], iteration_bounds = array<i64: 1>, scalar_prefetch = 0 : i64, scratch_operands = 1 : i64, tpu.core_type = #tpu.core_type<tc>, window_params = [{transform_indices = @transform_0, window_bounds = array<i64: 2, 8, 32>}, {pipeline_mode = #tpu.pipeline_mode<synchronous>, transform_indices = @transform_1, window_bounds = array<i64: 8, 8>}, {pipeline_mode = #tpu.pipeline_mode<synchronous>, transform_indices = @transform_2, window_bounds = array<i64: 8, 1>}, {pipeline_mode = #tpu.pipeline_mode<synchronous>, transform_indices = @transform_3, window_bounds = array<i64: 8, 32, 8>}, {pipeline_mode = #tpu.pipeline_mode<synchronous>, transform_indices = @transform_4, window_bounds = array<i64: 1, 8>}, {pipeline_mode = #tpu.pipeline_mode<synchronous>, transform_indices = @transform_5, window_bounds = array<i64: 8, 32>}, {pipeline_mode = #tpu.pipeline_mode<synchronous>, transform_indices = @transform_6, window_bounds = array<i64: 1, 32>}, {transform_indices = @transform_7, window_bounds = array<i64: 2, 32>}]} {
    %c0 = arith.constant 0 : index
    %c0_0 = arith.constant 0 : index
    %0 = vector.load %arg2[%c0, %c0_0] : memref<8x8xf32, #tpu.memory_space<vmem>>, vector<8x8xf32>
    %1 = vector.shape_cast %0 : vector<8x8xf32> to vector<1x8x8xf32>
    %2 = vector.shape_cast %1 : vector<1x8x8xf32> to vector<1x8x8xf32>
    %3 = vector.broadcast %2 : vector<1x8x8xf32> to vector<2x8x8xf32>
    %c0_1 = arith.constant 0 : index
    %c0_2 = arith.constant 0 : index
    %c0_3 = arith.constant 0 : index
    %4 = vector.load %arg1[%c0_1, %c0_2, %c0_3] : memref<2x8x32xf32, #tpu.memory_space<vmem>>, vector<2x8x32xf32>
    "tpu.trace_start"() <{level = 10 : i32, message = "bcd,bdw->bcw"}> : () -> ()
    %cst = arith.constant dense<0.000000e+00> : vector<2x8x32xf32>
    %5 = tpu.matmul %3, %4, %cst {dimension_numbers = #tpu.dot_dimension_numbers<[2], [1], [1], [2], [0, 0, 0, 1, 1, 2], [0], [0]>} : vector<2x8x8xf32>, vector<2x8x32xf32>, vector<2x8x32xf32> -> vector<2x8x32xf32>
    "tpu.trace_stop"() : () -> ()
    %c0_4 = arith.constant 0 : index
    %c0_5 = arith.constant 0 : index
    %6 = vector.load %arg3[%c0_4, %c0_5] : memref<8x1xf32, #tpu.memory_space<vmem>>, vector<8x1xf32>
    %7 = vector.shape_cast %6 : vector<8x1xf32> to vector<1x8x1xf32>
    %8 = vector.broadcast %7 : vector<1x8x1xf32> to vector<2x8x32xf32>
    %9 = arith.addf %5, %8 : vector<2x8x32xf32>
    %cst_6 = arith.constant 0.000000e+00 : f32
    %10 = vector.broadcast %cst_6 : f32 to vector<2x8x32xf32>
    %11 = arith.maximumf %9, %10 : vector<2x8x32xf32>
    %c0_7 = arith.constant 0 : index
    %c0_8 = arith.constant 0 : index
    %c0_9 = arith.constant 0 : index
    %12 = vector.load %arg9[%c0_7, %c0_8, %c0_9] : memref<2x8x32xf32, #tpu.memory_space<vmem>>, vector<2x8x32xf32>
    tpu.vector_store %arg9[%c0_7, %c0_8, %c0_9], %11 {strides = array<i32>} : memref<2x8x32xf32, #tpu.memory_space<vmem>>, vector<2x8x32xf32>,
    %c0_10 = arith.constant 0 : index
    %c0_11 = arith.constant 0 : index
    %c0_12 = arith.constant 0 : index
    %13 = vector.load %arg9[%c0_10, %c0_11, %c0_12] : memref<2x8x32xf32, #tpu.memory_space<vmem>>, vector<2x1x32xf32>
    %14 = vector.shape_cast %13 : vector<2x1x32xf32> to vector<2x32xf32>
    %c0_13 = arith.constant 0 : index
    %c0_14 = arith.constant 0 : index
    %c0_15 = arith.constant 0 : index
    %15 = vector.load %arg4[%c0_13, %c0_14, %c0_15] : memref<8x32x8xf32, #tpu.memory_space<vmem>>, vector<1x32x8xf32>
    %16 = vector.shape_cast %15 : vector<1x32x8xf32> to vector<32x8xf32>
    %cst_16 = arith.constant dense<0.000000e+00> : vector<2x8xf32>
    %17 = tpu.matmul %14, %16, %cst_16 {dimension_numbers = #tpu.dot_dimension_numbers<[1], [0], [0], [1], [0, 0, 1, 1], [], []>} : vector<2x32xf32>, vector<32x8xf32>, vector<2x8xf32> -> vector<2x8xf32>
    %c0_17 = arith.constant 0 : index
    %c1 = arith.constant 1 : index
    %c0_18 = arith.constant 0 : index
    %18 = vector.load %arg9[%c0_17, %c1, %c0_18] : memref<2x8x32xf32, #tpu.memory_space<vmem>>, vector<2x1x32xf32>
    %19 = vector.shape_cast %18 : vector<2x1x32xf32> to vector<2x32xf32>
    %c1_19 = arith.constant 1 : index
    %c0_20 = arith.constant 0 : index
    %c0_21 = arith.constant 0 : index
    %20 = vector.load %arg4[%c1_19, %c0_20, %c0_21] : memref<8x32x8xf32, #tpu.memory_space<vmem>>, vector<1x32x8xf32>
    %21 = vector.shape_cast %20 : vector<1x32x8xf32> to vector<32x8xf32>
    %cst_22 = arith.constant dense<0.000000e+00> : vector<2x8xf32>
    %22 = tpu.matmul %19, %21, %cst_22 {dimension_numbers = #tpu.dot_dimension_numbers<[1], [0], [0], [1], [0, 0, 1, 1], [], []>} : vector<2x32xf32>, vector<32x8xf32>, vector<2x8xf32> -> vector<2x8xf32>
    %23 = arith.addf %17, %22 : vector<2x8xf32>
    %c0_23 = arith.constant 0 : index
    %c2 = arith.constant 2 : index
    %c0_24 = arith.constant 0 : index
    %24 = vector.load %arg9[%c0_23, %c2, %c0_24] : memref<2x8x32xf32, #tpu.memory_space<vmem>>, vector<2x1x32xf32>
    %25 = vector.shape_cast %24 : vector<2x1x32xf32> to vector<2x32xf32>
    %c2_25 = arith.constant 2 : index
    %c0_26 = arith.constant 0 : index
    %c0_27 = arith.constant 0 : index
    %26 = vector.load %arg4[%c2_25, %c0_26, %c0_27] : memref<8x32x8xf32, #tpu.memory_space<vmem>>, vector<1x32x8xf32>
    %27 = vector.shape_cast %26 : vector<1x32x8xf32> to vector<32x8xf32>
    %cst_28 = arith.constant dense<0.000000e+00> : vector<2x8xf32>
    %28 = tpu.matmul %25, %27, %cst_28 {dimension_numbers = #tpu.dot_dimension_numbers<[1], [0], [0], [1], [0, 0, 1, 1], [], []>} : vector<2x32xf32>, vector<32x8xf32>, vector<2x8xf32> -> vector<2x8xf32>
    %29 = arith.addf %23, %28 : vector<2x8xf32>
    %c0_29 = arith.constant 0 : index
    %c3 = arith.constant 3 : index
    %c0_30 = arith.constant 0 : index
    %30 = vector.load %arg9[%c0_29, %c3, %c0_30] : memref<2x8x32xf32, #tpu.memory_space<vmem>>, vector<2x1x32xf32>
    %31 = vector.shape_cast %30 : vector<2x1x32xf32> to vector<2x32xf32>
    %c3_31 = arith.constant 3 : index
    %c0_32 = arith.constant 0 : index
    %c0_33 = arith.constant 0 : index
    %32 = vector.load %arg4[%c3_31, %c0_32, %c0_33] : memref<8x32x8xf32, #tpu.memory_space<vmem>>, vector<1x32x8xf32>
    %33 = vector.shape_cast %32 : vector<1x32x8xf32> to vector<32x8xf32>
    %cst_34 = arith.constant dense<0.000000e+00> : vector<2x8xf32>
    %34 = tpu.matmul %31, %33, %cst_34 {dimension_numbers = #tpu.dot_dimension_numbers<[1], [0], [0], [1], [0, 0, 1, 1], [], []>} : vector<2x32xf32>, vector<32x8xf32>, vector<2x8xf32> -> vector<2x8xf32>
    %35 = arith.addf %29, %34 : vector<2x8xf32>
    %c0_35 = arith.constant 0 : index
    %c4 = arith.constant 4 : index
    %c0_36 = arith.constant 0 : index
    %36 = vector.load %arg9[%c0_35, %c4, %c0_36] : memref<2x8x32xf32, #tpu.memory_space<vmem>>, vector<2x1x32xf32>
    %37 = vector.shape_cast %36 : vector<2x1x32xf32> to vector<2x32xf32>
    %c4_37 = arith.constant 4 : index
    %c0_38 = arith.constant 0 : index
    %c0_39 = arith.constant 0 : index
    %38 = vector.load %arg4[%c4_37, %c0_38, %c0_39] : memref<8x32x8xf32, #tpu.memory_space<vmem>>, vector<1x32x8xf32>
    %39 = vector.shape_cast %38 : vector<1x32x8xf32> to vector<32x8xf32>
    %cst_40 = arith.constant dense<0.000000e+00> : vector<2x8xf32>
    %40 = tpu.matmul %37, %39, %cst_40 {dimension_numbers = #tpu.dot_dimension_numbers<[1], [0], [0], [1], [0, 0, 1, 1], [], []>} : vector<2x32xf32>, vector<32x8xf32>, vector<2x8xf32> -> vector<2x8xf32>
    %41 = arith.addf %35, %40 : vector<2x8xf32>
    %c0_41 = arith.constant 0 : index
    %c5 = arith.constant 5 : index
    %c0_42 = arith.constant 0 : index
    %42 = vector.load %arg9[%c0_41, %c5, %c0_42] : memref<2x8x32xf32, #tpu.memory_space<vmem>>, vector<2x1x32xf32>
    %43 = vector.shape_cast %42 : vector<2x1x32xf32> to vector<2x32xf32>
    %c5_43 = arith.constant 5 : index
    %c0_44 = arith.constant 0 : index
    %c0_45 = arith.constant 0 : index
    %44 = vector.load %arg4[%c5_43, %c0_44, %c0_45] : memref<8x32x8xf32, #tpu.memory_space<vmem>>, vector<1x32x8xf32>
    %45 = vector.shape_cast %44 : vector<1x32x8xf32> to vector<32x8xf32>
    %cst_46 = arith.constant dense<0.000000e+00> : vector<2x8xf32>
    %46 = tpu.matmul %43, %45, %cst_46 {dimension_numbers = #tpu.dot_dimension_numbers<[1], [0], [0], [1], [0, 0, 1, 1], [], []>} : vector<2x32xf32>, vector<32x8xf32>, vector<2x8xf32> -> vector<2x8xf32>
    %47 = arith.addf %41, %46 : vector<2x8xf32>
    %c0_47 = arith.constant 0 : index
    %c6 = arith.constant 6 : index
    %c0_48 = arith.constant 0 : index
    %48 = vector.load %arg9[%c0_47, %c6, %c0_48] : memref<2x8x32xf32, #tpu.memory_space<vmem>>, vector<2x1x32xf32>
    %49 = vector.shape_cast %48 : vector<2x1x32xf32> to vector<2x32xf32>
    %c6_49 = arith.constant 6 : index
    %c0_50 = arith.constant 0 : index
    %c0_51 = arith.constant 0 : index
    %50 = vector.load %arg4[%c6_49, %c0_50, %c0_51] : memref<8x32x8xf32, #tpu.memory_space<vmem>>, vector<1x32x8xf32>
    %51 = vector.shape_cast %50 : vector<1x32x8xf32> to vector<32x8xf32>
    %cst_52 = arith.constant dense<0.000000e+00> : vector<2x8xf32>
    %52 = tpu.matmul %49, %51, %cst_52 {dimension_numbers = #tpu.dot_dimension_numbers<[1], [0], [0], [1], [0, 0, 1, 1], [], []>} : vector<2x32xf32>, vector<32x8xf32>, vector<2x8xf32> -> vector<2x8xf32>
    %53 = arith.addf %47, %52 : vector<2x8xf32>
    %c0_53 = arith.constant 0 : index
    %c7 = arith.constant 7 : index
    %c0_54 = arith.constant 0 : index
    %54 = vector.load %arg9[%c0_53, %c7, %c0_54] : memref<2x8x32xf32, #tpu.memory_space<vmem>>, vector<2x1x32xf32>
    %55 = vector.shape_cast %54 : vector<2x1x32xf32> to vector<2x32xf32>
    %c7_55 = arith.constant 7 : index
    %c0_56 = arith.constant 0 : index
    %c0_57 = arith.constant 0 : index
    %56 = vector.load %arg4[%c7_55, %c0_56, %c0_57] : memref<8x32x8xf32, #tpu.memory_space<vmem>>, vector<1x32x8xf32>
    %57 = vector.shape_cast %56 : vector<1x32x8xf32> to vector<32x8xf32>
    %cst_58 = arith.constant dense<0.000000e+00> : vector<2x8xf32>
    %58 = tpu.matmul %55, %57, %cst_58 {dimension_numbers = #tpu.dot_dimension_numbers<[1], [0], [0], [1], [0, 0, 1, 1], [], []>} : vector<2x32xf32>, vector<32x8xf32>, vector<2x8xf32> -> vector<2x8xf32>
    %59 = arith.addf %53, %58 : vector<2x8xf32>
    %c0_59 = arith.constant 0 : index
    %c0_60 = arith.constant 0 : index
    %60 = vector.load %arg5[%c0_59, %c0_60] : memref<1x8xf32, #tpu.memory_space<vmem>>, vector<1x8xf32>
    %61 = vector.broadcast %60 : vector<1x8xf32> to vector<2x8xf32>
    %62 = arith.addf %59, %61 : vector<2x8xf32>
    %cst_61 = arith.constant 0.000000e+00 : f32
    %63 = vector.broadcast %cst_61 : f32 to vector<2x8xf32>
    %64 = arith.maximumf %62, %63 : vector<2x8xf32>
    %c0_62 = arith.constant 0 : index
    %c0_63 = arith.constant 0 : index
    %65 = vector.load %arg6[%c0_62, %c0_63] : memref<8x32xf32, #tpu.memory_space<vmem>>, vector<8x32xf32>
    %cst_64 = arith.constant dense<0.000000e+00> : vector<2x32xf32>
    %66 = tpu.matmul %64, %65, %cst_64 {dimension_numbers = #tpu.dot_dimension_numbers<[1], [0], [0], [1], [0, 0, 1, 1], [], []>} : vector<2x8xf32>, vector<8x32xf32>, vector<2x32xf32> -> vector<2x32xf32>
    %c0_65 = arith.constant 0 : index
    %c0_66 = arith.constant 0 : index
    %67 = vector.load %arg7[%c0_65, %c0_66] : memref<1x32xf32, #tpu.memory_space<vmem>>, vector<1x32xf32>
    %68 = vector.broadcast %67 : vector<1x32xf32> to vector<2x32xf32>
    %69 = arith.addf %66, %68 : vector<2x32xf32>
    %c0_67 = arith.constant 0 : index
    %c0_68 = arith.constant 0 : index
    %70 = vector.load %arg8[%c0_67, %c0_68] : memref<2x32xf32, #tpu.memory_space<vmem>>, vector<2x32xf32>
    tpu.vector_store %arg8[%c0_67, %c0_68], %69 {strides = array<i32>} : memref<2x32xf32, #tpu.memory_space<vmem>>, vector<2x32xf32>,
    return
  }
  func.func @transform_0(%arg0: i32) -> (i32, i32, i32) {
    %c0_i32 = arith.constant 0 : i32
    %c0_i32_0 = arith.constant 0 : i32
    %c0_i32_1 = arith.constant 0 : i32
    return %arg0, %c0_i32, %c0_i32_0 : i32, i32, i32
  }
  func.func @transform_1(%arg0: i32) -> (i32, i32) {
    %c0_i32 = arith.constant 0 : i32
    %c0_i32_0 = arith.constant 0 : i32
    %c0_i32_1 = arith.constant 0 : i32
    return %c0_i32, %c0_i32_0 : i32, i32
  }
  func.func @transform_2(%arg0: i32) -> (i32, i32) {
    %c0_i32 = arith.constant 0 : i32
    %c0_i32_0 = arith.constant 0 : i32
    %c0_i32_1 = arith.constant 0 : i32
    return %c0_i32, %c0_i32_0 : i32, i32
  }
  func.func @transform_3(%arg0: i32) -> (i32, i32, i32) {
    %c0_i32 = arith.constant 0 : i32
    %c0_i32_0 = arith.constant 0 : i32
    %c0_i32_1 = arith.constant 0 : i32
    %c0_i32_2 = arith.constant 0 : i32
    return %c0_i32, %c0_i32_0, %c0_i32_1 : i32, i32, i32
  }
  func.func @transform_4(%arg0: i32) -> (i32, i32) {
    %c0_i32 = arith.constant 0 : i32
    %c0_i32_0 = arith.constant 0 : i32
    %c0_i32_1 = arith.constant 0 : i32
    return %c0_i32, %c0_i32_0 : i32, i32
  }
  func.func @transform_5(%arg0: i32) -> (i32, i32) {
    %c0_i32 = arith.constant 0 : i32
    %c0_i32_0 = arith.constant 0 : i32
    %c0_i32_1 = arith.constant 0 : i32
    return %c0_i32, %c0_i32_0 : i32, i32
  }
  func.func @transform_6(%arg0: i32) -> (i32, i32) {
    %c0_i32 = arith.constant 0 : i32
    %c0_i32_0 = arith.constant 0 : i32
    %c0_i32_1 = arith.constant 0 : i32
    return %c0_i32, %c0_i32_0 : i32, i32
  }
  func.func @transform_7(%arg0: i32) -> (i32, i32) {
    %c0_i32 = arith.constant 0 : i32
    %c0_i32_0 = arith.constant 0 : i32
    return %arg0, %c0_i32 : i32, i32
  }
}

</mosaic_0001>

<llo_original>
// kernel: tpu_custom_call.1
$region0: #{tpu_custom_call.1}
  #allocation0 [shape = 'u32[]', space=smem, size = 0x4, offset = 0x4, fixed_abs, tag = 'smem constant byte address 0x4 - core index']
  #allocation1 [shape = 'u32[144,128]{1,0:T(1,128)}', space=vmem, size = 0x12000, scoped, tag = 'internal scratch']
  #allocation2 [shape = 'f32[2,8,32]{2,1,0:T(8,128)}', space=vmem, size = 0x2000, scoped, tag = 'scratch operand']
  %s0 = inlined_call_operand.vmem [shape: f32[2,8,32], index: 0, kind: input, shape index: {}]
  %s1 = inlined_call_operand.vmem [shape: f32[8,8], index: 1, kind: input, shape index: {}]
  %s2 = inlined_call_operand.vmem [shape: f32[8,1], index: 2, kind: input, shape index: {}]
  %s3 = inlined_call_operand.vmem [shape: f32[8,32,8], index: 3, kind: input, shape index: {}]
  %s4 = inlined_call_operand.vmem [shape: f32[1,8], index: 4, kind: input, shape index: {}]
  %s5 = inlined_call_operand.vmem [shape: f32[8,32], index: 5, kind: input, shape index: {}]
  %s6 = inlined_call_operand.vmem [shape: f32[1,32], index: 6, kind: input, shape index: {}]
  %s7 = inlined_call_operand.hbm [shape: f32[2,32], index: 7, kind: output, shape index: {}]
  %s8 = sld [smem:[#allocation0]]
  $region38: #{tpu_custom_call.1} parent=0
    _
  %s10 = ssub.s32 1, %s8
  %s11 = scalar_select 0, %s10, %s8
  $region1: #{tpu_custom_call.1} parent=0
    #allocation3 [shape = 'u8[1024]{0}', space=vmem, size = 0x400, scoped, tag = 'output window, operand 0, single buffered']
    #allocation4 [shape = 's32[1]{0}', space=sflag, size = 0x4, scoped, tag = 'scoped memory for tpu_custom_call.1']
    %12 = vsyncpa [#allocation4], 0
    // Predicated region
    $region2: #{tpu_custom_call.1} parent=1 // pred_check
      _
    $region3: #{tpu_custom_call.1} parent=1 // pred_check_branch
      %14 = sbr.rel (0) target = $region5
    $region4: #{tpu_custom_call.1} parent=1 // pred_region
      _
    $region5: #{tpu_custom_call.1} parent=1 // pred_fallthru
      _
    // Predicated region
    $region6: #{tpu_custom_call.1} parent=1 // pred_check
      _
    $region7: #{tpu_custom_call.1} parent=1 // pred_check_branch
      %16 = sbr.rel (0) target = $region9
    $region8: #{tpu_custom_call.1} parent=1 // pred_region
      _
    $region9: #{tpu_custom_call.1} parent=1 // pred_fallthru
      _
    // Predicated region
    $region10: #{tpu_custom_call.1} parent=1 // pred_check
      _
    $region11: #{tpu_custom_call.1} parent=1 // pred_check_branch
      %18 = sbr.rel (0) target = $region13
    $region12: #{tpu_custom_call.1} parent=1 // pred_region
      _
    $region13: #{tpu_custom_call.1} parent=1 // pred_fallthru
      _
    // Predicated region
    $region14: #{tpu_custom_call.1} parent=1 // pred_check
      _
    $region15: #{tpu_custom_call.1} parent=1 // pred_check_branch
      %20 = sbr.rel (0) target = $region17
    $region16: #{tpu_custom_call.1} parent=1 // pred_region
      _
    $region17: #{tpu_custom_call.1} parent=1 // pred_fallthru
      _
    // Predicated region
    $region18: #{tpu_custom_call.1} parent=1 // pred_check
      _
    $region19: #{tpu_custom_call.1} parent=1 // pred_check_branch
      %22 = sbr.rel (0) target = $region21
    $region20: #{tpu_custom_call.1} parent=1 // pred_region
      _
    $region21: #{tpu_custom_call.1} parent=1 // pred_fallthru
      _
    // Predicated region
    $region22: #{tpu_custom_call.1} parent=1 // pred_check
      _
    $region23: #{tpu_custom_call.1} parent=1 // pred_check_branch
      %24 = sbr.rel (0) target = $region25
    $region24: #{tpu_custom_call.1} parent=1 // pred_region
      _
    $region25: #{tpu_custom_call.1} parent=1 // pred_fallthru
      _
    // Predicated region
    $region26: #{tpu_custom_call.1} parent=1 // pred_check
      _
    $region27: #{tpu_custom_call.1} parent=1 // pred_check_branch
      %26 = sbr.rel (0) target = $region29
    $region28: #{tpu_custom_call.1} parent=1 // pred_region
      _
    $region29: #{tpu_custom_call.1} parent=1 // pred_fallthru
      _
    %v27 = vld [vmem:[%s1] sm:$0xff]
    %v28 = vld [vmem:[%s0] sm:$0xff]
    %v29 = vld [vmem:[%s0 + $0x8] sm:$0xff]
    %v30 = vld [vmem:[%s2] sm:$0xff]
    %32 = vset.pattern.permute.xlu0 0
    %33 = vperm.xlu0 %32, %v30
    %v34 = vpop.permute.xlu0 %33
    %vm36 = vcmask 64512
    %v38 = vsel %vm36, %v27, 0
    %40 = vmatprep.subr.mxu0 0.0
    %41 = vmatpush1.msra.mxu0 %v28
    %42 = vmatprep.subr.mxu0 0.0
    %43 = vmatpush1.msra.mxu0 0.0
    %44 = vmatprep.subr.mxu0 0.0
    %45 = vmatpush1.msra.mxu0 0.0
    %46 = vmatprep.subr.mxu0 0.0
    %47 = vmatpush1.msra.mxu0 0.0
    %48 = vmatprep.subr.mxu0 0.0
    %49 = vmatpush1.msra.mxu0 0.0
    %50 = vmatprep.subr.mxu0 0.0
    %51 = vmatpush1.msra.mxu0 0.0
    %52 = vmatprep.subr.mxu0 0.0
    %53 = vmatpush1.msra.mxu0 0.0
    %54 = vmatprep.subr.mxu0 0.0
    %55 = vmatpush1.msra.mxu0 0.0
    %56 = vmatprep.subr.mxu0 0.0
    %57 = vmatpush1.msra.mxu0 0.0
    %58 = vmatprep.subr.mxu0 0.0
    %59 = vmatpush1.msra.mxu0 0.0
    %60 = vmatprep.subr.mxu0 0.0
    %61 = vmatpush1.msra.mxu0 0.0
    %62 = vmatprep.subr.mxu0 0.0
    %63 = vmatpush1.msra.mxu0 0.0
    %64 = vmatprep.subr.mxu0 0.0
    %65 = vmatpush1.msra.mxu0 0.0
    %66 = vmatprep.subr.mxu0 0.0
    %67 = vmatpush1.msra.mxu0 0.0
    %68 = vmatprep.subr.mxu0 0.0
    %69 = vmatpush1.msra.mxu0 0.0
    %70 = vmatprep.subr.mxu0 0.0
    %71 = vmatpush1.msra.mxu0 0.0
    %72 = vmatprep.subr.mxu0 0.0
    %73 = vmatpush1.msra.mxu0 0.0
    %74 = vmatprep.subr.mxu0 0.0
    %75 = vmatpush1.msra.mxu0 0.0
    %76 = vmatprep.subr.mxu0 0.0
    %77 = vmatpush1.msra.mxu0 0.0
    %78 = vmatprep.subr.mxu0 0.0
    %79 = vmatpush1.msra.mxu0 0.0
    %80 = vmatprep.subr.mxu0 0.0
    %81 = vmatpush1.msra.mxu0 0.0
    %82 = vmatprep.subr.mxu0 0.0
    %83 = vmatpush1.msra.mxu0 0.0
    %84 = vmatprep.subr.mxu0 0.0
    %85 = vmatpush1.msra.mxu0 0.0
    %86 = vmatprep.subr.mxu0 0.0
    %87 = vmatpush1.msra.mxu0 0.0
    %88 = vmatprep.subr.mxu0 0.0
    %89 = vmatpush1.msra.mxu0 0.0
    %90 = vmatprep.subr.mxu0 0.0
    %91 = vmatpush1.msra.mxu0 0.0
    %92 = vmatprep.subr.mxu0 0.0
    %93 = vmatpush1.msra.mxu0 0.0
    %94 = vmatprep.subr.mxu0 0.0
    %95 = vmatpush1.msra.mxu0 0.0
    %96 = vmatprep.subr.mxu0 0.0
    %97 = vmatpush1.msra.mxu0 0.0
    %98 = vmatprep.subr.mxu0 0.0
    %99 = vmatpush1.msra.mxu0 0.0
    %100 = vmatprep.subr.mxu0 0.0
    %101 = vmatpush1.msra.mxu0 0.0
    %102 = vmatprep.subr.mxu0 0.0
    %103 = vmatpush1.msra.mxu0 0.0
    %104 = vmatprep.mubr.f32.mxu0 0.0
    %105 = vmatmul.mubr.f32.gmra.mrb[0].mxu0 %v38
    %v106 = vpop.f32.mrb[0].mxu0
    %v107 = vadd.f32 %v34, %v106
    %v108 = vpop.f32.mrb[0].mxu0
    %109 = vdwg.mxu0
    %110 = vmatprep.subr.mxu0 0.0
    %111 = vmatpush1.msra.mxu0 %v29
    %112 = vmatprep.subr.mxu0 0.0
    %113 = vmatpush1.msra.mxu0 0.0
    %114 = vmatprep.subr.mxu0 0.0
    %115 = vmatpush1.msra.mxu0 0.0
    %116 = vmatprep.subr.mxu0 0.0
    %117 = vmatpush1.msra.mxu0 0.0
    %118 = vmatprep.subr.mxu0 0.0
    %119 = vmatpush1.msra.mxu0 0.0
    %120 = vmatprep.subr.mxu0 0.0
    %121 = vmatpush1.msra.mxu0 0.0
    %122 = vmatprep.subr.mxu0 0.0
    %123 = vmatpush1.msra.mxu0 0.0
    %124 = vmatprep.subr.mxu0 0.0
    %125 = vmatpush1.msra.mxu0 0.0
    %126 = vmatprep.subr.mxu0 0.0
    %127 = vmatpush1.msra.mxu0 0.0
    %128 = vmatprep.subr.mxu0 0.0
    %129 = vmatpush1.msra.mxu0 0.0
    %130 = vmatprep.subr.mxu0 0.0
    %131 = vmatpush1.msra.mxu0 0.0
    %132 = vmatprep.subr.mxu0 0.0
    %133 = vmatpush1.msra.mxu0 0.0
    %134 = vmatprep.subr.mxu0 0.0
    %135 = vmatpush1.msra.mxu0 0.0
    %136 = vmatprep.subr.mxu0 0.0
    %137 = vmatpush1.msra.mxu0 0.0
    %138 = vmatprep.subr.mxu0 0.0
    %139 = vmatpush1.msra.mxu0 0.0
    %140 = vmatprep.subr.mxu0 0.0
    %141 = vmatpush1.msra.mxu0 0.0
    %142 = vmatprep.subr.mxu0 0.0
    %143 = vmatpush1.msra.mxu0 0.0
    %144 = vmatprep.subr.mxu0 0.0
    %145 = vmatpush1.msra.mxu0 0.0
    %146 = vmatprep.subr.mxu0 0.0
    %147 = vmatpush1.msra.mxu0 0.0
    %148 = vmatprep.subr.mxu0 0.0
    %149 = vmatpush1.msra.mxu0 0.0
    %150 = vmatprep.subr.mxu0 0.0
    %151 = vmatpush1.msra.mxu0 0.0
    %152 = vmatprep.subr.mxu0 0.0
    %153 = vmatpush1.msra.mxu0 0.0
    %154 = vmatprep.subr.mxu0 0.0
    %155 = vmatpush1.msra.mxu0 0.0
    %156 = vmatprep.subr.mxu0 0.0
    %157 = vmatpush1.msra.mxu0 0.0
    %158 = vmatprep.subr.mxu0 0.0
    %159 = vmatpush1.msra.mxu0 0.0
    %160 = vmatprep.subr.mxu0 0.0
    %161 = vmatpush1.msra.mxu0 0.0
    %162 = vmatprep.subr.mxu0 0.0
    %163 = vmatpush1.msra.mxu0 0.0
    %164 = vmatprep.subr.mxu0 0.0
    %165 = vmatpush1.msra.mxu0 0.0
    %166 = vmatprep.subr.mxu0 0.0
    %167 = vmatpush1.msra.mxu0 0.0
    %168 = vmatprep.subr.mxu0 0.0
    %169 = vmatpush1.msra.mxu0 0.0
    %170 = vmatprep.subr.mxu0 0.0
    %171 = vmatpush1.msra.mxu0 0.0
    %172 = vmatprep.subr.mxu0 0.0
    %173 = vmatpush1.msra.mxu0 0.0
    %174 = vmatprep.mubr.f32.mxu0 0.0
    %175 = vmatmul.mubr.f32.gmra.mrb[0].mxu0 %v38
    %v176 = vpop.f32.mrb[0].mxu0
    %v177 = vadd.f32 %v34, %v176
    %v178 = vpop.f32.mrb[0].mxu0
    %179 = vdwg.mxu0
    %v180 = vmax.f32 %v107, 0.0
    %v181 = vmax.f32 %v177, 0.0
    %vm182 = vcmask 261120
    %183 = vst.msk [vmem:[#allocation2] sm:$0xff] %vm182, %v180
    %184 = vst.msk [vmem:[#allocation2 + $0x8] sm:$0xff] %vm182, %v181
    %v185 = vld [vmem:[#allocation2] sm:$0x1]
    %v186 = vld [vmem:[#allocation2 + $0x8] sm:$0x1]
    %v187 = vld [vmem:[%s3] sm:$0xff]
    %v188 = vld [vmem:[%s3 + $0x8] sm:$0xff]
    %v189 = vld [vmem:[%s3 + $0x10] sm:$0xff]
    %v190 = vld [vmem:[%s3 + $0x18] sm:$0xff]
    %v191 = vld [vmem:[#allocation2 + $0x1] sm:$0x1]
    %v192 = vld [vmem:[#allocation2 + $0x9] sm:$0x1]
    %s193 = scalar_lea.vmem %s3, 32
    %v194 = vld [vmem:[%s193] sm:$0xff]
    %v195 = vld [vmem:[%s193 + $0x8] sm:$0xff]
    %v196 = vld [vmem:[%s193 + $0x10] sm:$0xff]
    %v197 = vld [vmem:[%s193 + $0x18] sm:$0xff]
    %v200 = vrot.slane %v192, 7
    %vm201 = vcmask 1041409
    %v202 = vsel %vm201, %v200, %v191
    %v203 = vsel %vm182, %v202, 0
    %205 = vmatprep.subr.mxu0 0.0
    %206 = vmatpush1.msra.mxu0 %v194
    %207 = vmatprep.subr.mxu0 0.0
    %208 = vmatpush1.msra.mxu0 %v195
    %209 = vmatprep.subr.mxu0 0.0
    %210 = vmatpush1.msra.mxu0 %v196
    %211 = vmatprep.subr.mxu0 0.0
    %212 = vmatpush1.msra.mxu0 %v197
    %213 = vmatprep.subr.mxu0 0.0
    %214 = vmatpush1.msra.mxu0 0.0
    %215 = vmatprep.subr.mxu0 0.0
    %216 = vmatpush1.msra.mxu0 0.0
    %217 = vmatprep.subr.mxu0 0.0
    %218 = vmatpush1.msra.mxu0 0.0
    %219 = vmatprep.subr.mxu0 0.0
    %220 = vmatpush1.msra.mxu0 0.0
    %221 = vmatprep.subr.mxu0 0.0
    %222 = vmatpush1.msra.mxu0 0.0
    %223 = vmatprep.subr.mxu0 0.0
    %224 = vmatpush1.msra.mxu0 0.0
    %225 = vmatprep.subr.mxu0 0.0
    %226 = vmatpush1.msra.mxu0 0.0
    %227 = vmatprep.subr.mxu0 0.0
    %228 = vmatpush1.msra.mxu0 0.0
    %229 = vmatprep.subr.mxu0 0.0
    %230 = vmatpush1.msra.mxu0 0.0
    %231 = vmatprep.subr.mxu0 0.0
    %232 = vmatpush1.msra.mxu0 0.0
    %233 = vmatprep.subr.mxu0 0.0
    %234 = vmatpush1.msra.mxu0 0.0
    %235 = vmatprep.subr.mxu0 0.0
    %236 = vmatpush1.msra.mxu0 0.0
    %237 = vmatprep.subr.mxu0 0.0
    %238 = vmatpush1.msra.mxu0 0.0
    %239 = vmatprep.subr.mxu0 0.0
    %240 = vmatpush1.msra.mxu0 0.0
    %241 = vmatprep.subr.mxu0 0.0
    %242 = vmatpush1.msra.mxu0 0.0
    %243 = vmatprep.subr.mxu0 0.0
    %244 = vmatpush1.msra.mxu0 0.0
    %245 = vmatprep.subr.mxu0 0.0
    %246 = vmatpush1.msra.mxu0 0.0
    %247 = vmatprep.subr.mxu0 0.0
    %248 = vmatpush1.msra.mxu0 0.0
    %249 = vmatprep.subr.mxu0 0.0
    %250 = vmatpush1.msra.mxu0 0.0
    %251 = vmatprep.subr.mxu0 0.0
    %252 = vmatpush1.msra.mxu0 0.0
    %253 = vmatprep.subr.mxu0 0.0
    %254 = vmatpush1.msra.mxu0 0.0
    %255 = vmatprep.subr.mxu0 0.0
    %256 = vmatpush1.msra.mxu0 0.0
    %257 = vmatprep.subr.mxu0 0.0
    %258 = vmatpush1.msra.mxu0 0.0
    %259 = vmatprep.subr.mxu0 0.0
    %260 = vmatpush1.msra.mxu0 0.0
    %261 = vmatprep.subr.mxu0 0.0
    %262 = vmatpush1.msra.mxu0 0.0
    %263 = vmatprep.subr.mxu0 0.0
    %264 = vmatpush1.msra.mxu0 0.0
    %265 = vmatprep.subr.mxu0 0.0
    %266 = vmatpush1.msra.mxu0 0.0
    %267 = vmatprep.subr.mxu0 0.0
    %268 = vmatpush1.msra.mxu0 0.0
    %269 = vmatprep.mubr.f32.mxu0 0.0
    %270 = vmatmul.mubr.f32.gmra.mrb[0].mxu0 %v203
    %v271 = vpop.f32.mrb[0].mxu0
    %v272 = vadd.f32 0.0, %v271
    %v273 = vpop.f32.mrb[0].mxu0
    %274 = vdwg.mxu0
    %v277 = vrot.slane %v186, 7
    %v278 = vsel %vm201, %v277, %v185
    %v279 = vsel %vm182, %v278, 0
    %281 = vmatprep.subr.mxu0 0.0
    %282 = vmatpush1.msra.mxu0 %v187
    %283 = vmatprep.subr.mxu0 0.0
    %284 = vmatpush1.msra.mxu0 %v188
    %285 = vmatprep.subr.mxu0 0.0
    %286 = vmatpush1.msra.mxu0 %v189
    %287 = vmatprep.subr.mxu0 0.0
    %288 = vmatpush1.msra.mxu0 %v190
    %289 = vmatprep.subr.mxu0 0.0
    %290 = vmatpush1.msra.mxu0 0.0
    %291 = vmatprep.subr.mxu0 0.0
    %292 = vmatpush1.msra.mxu0 0.0
    %293 = vmatprep.subr.mxu0 0.0
    %294 = vmatpush1.msra.mxu0 0.0
    %295 = vmatprep.subr.mxu0 0.0
    %296 = vmatpush1.msra.mxu0 0.0
    %297 = vmatprep.subr.mxu0 0.0
    %298 = vmatpush1.msra.mxu0 0.0
    %299 = vmatprep.subr.mxu0 0.0
    %300 = vmatpush1.msra.mxu0 0.0
    %301 = vmatprep.subr.mxu0 0.0
    %302 = vmatpush1.msra.mxu0 0.0
    %303 = vmatprep.subr.mxu0 0.0
    %304 = vmatpush1.msra.mxu0 0.0
    %305 = vmatprep.subr.mxu0 0.0
    %306 = vmatpush1.msra.mxu0 0.0
    %307 = vmatprep.subr.mxu0 0.0
    %308 = vmatpush1.msra.mxu0 0.0
    %309 = vmatprep.subr.mxu0 0.0
    %310 = vmatpush1.msra.mxu0 0.0
    %311 = vmatprep.subr.mxu0 0.0
    %312 = vmatpush1.msra.mxu0 0.0
    %313 = vmatprep.subr.mxu0 0.0
    %314 = vmatpush1.msra.mxu0 0.0
    %315 = vmatprep.subr.mxu0 0.0
    %316 = vmatpush1.msra.mxu0 0.0
    %317 = vmatprep.subr.mxu0 0.0
    %318 = vmatpush1.msra.mxu0 0.0
    %319 = vmatprep.subr.mxu0 0.0
    %320 = vmatpush1.msra.mxu0 0.0
    %321 = vmatprep.subr.mxu0 0.0
    %322 = vmatpush1.msra.mxu0 0.0
    %323 = vmatprep.subr.mxu0 0.0
    %324 = vmatpush1.msra.mxu0 0.0
    %325 = vmatprep.subr.mxu0 0.0
    %326 = vmatpush1.msra.mxu0 0.0
    %327 = vmatprep.subr.mxu0 0.0
    %328 = vmatpush1.msra.mxu0 0.0
    %329 = vmatprep.subr.mxu0 0.0
    %330 = vmatpush1.msra.mxu0 0.0
    %331 = vmatprep.subr.mxu0 0.0
    %332 = vmatpush1.msra.mxu0 0.0
    %333 = vmatprep.subr.mxu0 0.0
    %334 = vmatpush1.msra.mxu0 0.0
    %335 = vmatprep.subr.mxu0 0.0
    %336 = vmatpush1.msra.mxu0 0.0
    %337 = vmatprep.subr.mxu0 0.0
    %338 = vmatpush1.msra.mxu0 0.0
    %339 = vmatprep.subr.mxu0 0.0
    %340 = vmatpush1.msra.mxu0 0.0
    %341 = vmatprep.subr.mxu0 0.0
    %342 = vmatpush1.msra.mxu0 0.0
    %343 = vmatprep.subr.mxu0 0.0
    %344 = vmatpush1.msra.mxu0 0.0
    %345 = vmatprep.mubr.f32.mxu0 0.0
    %346 = vmatmul.mubr.f32.gmra.mrb[0].mxu0 %v279
    %v347 = vpop.f32.mrb[0].mxu0
    %v348 = vadd.f32 %v272, %v347
    %v349 = vpop.f32.mrb[0].mxu0
    %350 = vdwg.mxu0
    %v351 = vld [vmem:[#allocation2 + $0x2] sm:$0x1]
    %v352 = vld [vmem:[#allocation2 + $0xa] sm:$0x1]
    %s353 = scalar_lea.vmem %s3, 64
    %v354 = vld [vmem:[%s353] sm:$0xff]
    %v355 = vld [vmem:[%s353 + $0x8] sm:$0xff]
    %v356 = vld [vmem:[%s353 + $0x10] sm:$0xff]
    %v357 = vld [vmem:[%s353 + $0x18] sm:$0xff]
    %v360 = vrot.slane %v352, 7
    %v361 = vsel %vm201, %v360, %v351
    %v362 = vsel %vm182, %v361, 0
    %364 = vmatprep.subr.mxu0 0.0
    %365 = vmatpush1.msra.mxu0 %v354
    %366 = vmatprep.subr.mxu0 0.0
    %367 = vmatpush1.msra.mxu0 %v355
    %368 = vmatprep.subr.mxu0 0.0
    %369 = vmatpush1.msra.mxu0 %v356
    %370 = vmatprep.subr.mxu0 0.0
    %371 = vmatpush1.msra.mxu0 %v357
    %372 = vmatprep.subr.mxu0 0.0
    %373 = vmatpush1.msra.mxu0 0.0
    %374 = vmatprep.subr.mxu0 0.0
    %375 = vmatpush1.msra.mxu0 0.0
    %376 = vmatprep.subr.mxu0 0.0
    %377 = vmatpush1.msra.mxu0 0.0
    %378 = vmatprep.subr.mxu0 0.0
    %379 = vmatpush1.msra.mxu0 0.0
    %380 = vmatprep.subr.mxu0 0.0
    %381 = vmatpush1.msra.mxu0 0.0
    %382 = vmatprep.subr.mxu0 0.0
    %383 = vmatpush1.msra.mxu0 0.0
    %384 = vmatprep.subr.mxu0 0.0
    %385 = vmatpush1.msra.mxu0 0.0
    %386 = vmatprep.subr.mxu0 0.0
    %387 = vmatpush1.msra.mxu0 0.0
    %388 = vmatprep.subr.mxu0 0.0
    %389 = vmatpush1.msra.mxu0 0.0
    %390 = vmatprep.subr.mxu0 0.0
    %391 = vmatpush1.msra.mxu0 0.0
    %392 = vmatprep.subr.mxu0 0.0
    %393 = vmatpush1.msra.mxu0 0.0
    %394 = vmatprep.subr.mxu0 0.0
    %395 = vmatpush1.msra.mxu0 0.0
    %396 = vmatprep.subr.mxu0 0.0
    %397 = vmatpush1.msra.mxu0 0.0
    %398 = vmatprep.subr.mxu0 0.0
    %399 = vmatpush1.msra.mxu0 0.0
    %400 = vmatprep.subr.mxu0 0.0
    %401 = vmatpush1.msra.mxu0 0.0
    %402 = vmatprep.subr.mxu0 0.0
    %403 = vmatpush1.msra.mxu0 0.0
    %404 = vmatprep.subr.mxu0 0.0
    %405 = vmatpush1.msra.mxu0 0.0
    %406 = vmatprep.subr.mxu0 0.0
    %407 = vmatpush1.msra.mxu0 0.0
    %408 = vmatprep.subr.mxu0 0.0
    %409 = vmatpush1.msra.mxu0 0.0
    %410 = vmatprep.subr.mxu0 0.0
    %411 = vmatpush1.msra.mxu0 0.0
    %412 = vmatprep.subr.mxu0 0.0
    %413 = vmatpush1.msra.mxu0 0.0
    %414 = vmatprep.subr.mxu0 0.0
    %415 = vmatpush1.msra.mxu0 0.0
    %416 = vmatprep.subr.mxu0 0.0
    %417 = vmatpush1.msra.mxu0 0.0
    %418 = vmatprep.subr.mxu0 0.0
    %419 = vmatpush1.msra.mxu0 0.0
    %420 = vmatprep.subr.mxu0 0.0
    %421 = vmatpush1.msra.mxu0 0.0
    %422 = vmatprep.subr.mxu0 0.0
    %423 = vmatpush1.msra.mxu0 0.0
    %424 = vmatprep.subr.mxu0 0.0
    %425 = vmatpush1.msra.mxu0 0.0
    %426 = vmatprep.subr.mxu0 0.0
    %427 = vmatpush1.msra.mxu0 0.0
    %428 = vmatprep.mubr.f32.mxu0 0.0
    %429 = vmatmul.mubr.f32.gmra.mrb[0].mxu0 %v362
    %v430 = vpop.f32.mrb[0].mxu0
    %v431 = vadd.f32 0.0, %v430
    %v432 = vpop.f32.mrb[0].mxu0
    %433 = vdwg.mxu0
    %v434 = vadd.f32 %v348, %v431
    %v435 = vld [vmem:[#allocation2 + $0x3] sm:$0x1]
    %v436 = vld [vmem:[#allocation2 + $0xb] sm:$0x1]
    %s437 = scalar_lea.vmem %s3, 96
    %v438 = vld [vmem:[%s437] sm:$0xff]
    %v439 = vld [vmem:[%s437 + $0x8] sm:$0xff]
    %v440 = vld [vmem:[%s437 + $0x10] sm:$0xff]
    %v441 = vld [vmem:[%s437 + $0x18] sm:$0xff]
    %v444 = vrot.slane %v436, 7
    %v445 = vsel %vm201, %v444, %v435
    %v446 = vsel %vm182, %v445, 0
    %448 = vmatprep.subr.mxu0 0.0
    %449 = vmatpush1.msra.mxu0 %v438
    %450 = vmatprep.subr.mxu0 0.0
    %451 = vmatpush1.msra.mxu0 %v439
    %452 = vmatprep.subr.mxu0 0.0
    %453 = vmatpush1.msra.mxu0 %v440
    %454 = vmatprep.subr.mxu0 0.0
    %455 = vmatpush1.msra.mxu0 %v441
    %456 = vmatprep.subr.mxu0 0.0
    %457 = vmatpush1.msra.mxu0 0.0
    %458 = vmatprep.subr.mxu0 0.0
    %459 = vmatpush1.msra.mxu0 0.0
    %460 = vmatprep.subr.mxu0 0.0
    %461 = vmatpush1.msra.mxu0 0.0
    %462 = vmatprep.subr.mxu0 0.0
    %463 = vmatpush1.msra.mxu0 0.0
    %464 = vmatprep.subr.mxu0 0.0
    %465 = vmatpush1.msra.mxu0 0.0
    %466 = vmatprep.subr.mxu0 0.0
    %467 = vmatpush1.msra.mxu0 0.0
    %468 = vmatprep.subr.mxu0 0.0
    %469 = vmatpush1.msra.mxu0 0.0
    %470 = vmatprep.subr.mxu0 0.0
    %471 = vmatpush1.msra.mxu0 0.0
    %472 = vmatprep.subr.mxu0 0.0
    %473 = vmatpush1.msra.mxu0 0.0
    %474 = vmatprep.subr.mxu0 0.0
    %475 = vmatpush1.msra.mxu0 0.0
    %476 = vmatprep.subr.mxu0 0.0
    %477 = vmatpush1.msra.mxu0 0.0
    %478 = vmatprep.subr.mxu0 0.0
    %479 = vmatpush1.msra.mxu0 0.0
    %480 = vmatprep.subr.mxu0 0.0
    %481 = vmatpush1.msra.mxu0 0.0
    %482 = vmatprep.subr.mxu0 0.0
    %483 = vmatpush1.msra.mxu0 0.0
    %484 = vmatprep.subr.mxu0 0.0
    %485 = vmatpush1.msra.mxu0 0.0
    %486 = vmatprep.subr.mxu0 0.0
    %487 = vmatpush1.msra.mxu0 0.0
    %488 = vmatprep.subr.mxu0 0.0
    %489 = vmatpush1.msra.mxu0 0.0
    %490 = vmatprep.subr.mxu0 0.0
    %491 = vmatpush1.msra.mxu0 0.0
    %492 = vmatprep.subr.mxu0 0.0
    %493 = vmatpush1.msra.mxu0 0.0
    %494 = vmatprep.subr.mxu0 0.0
    %495 = vmatpush1.msra.mxu0 0.0
    %496 = vmatprep.subr.mxu0 0.0
    %497 = vmatpush1.msra.mxu0 0.0
    %498 = vmatprep.subr.mxu0 0.0
    %499 = vmatpush1.msra.mxu0 0.0
    %500 = vmatprep.subr.mxu0 0.0
    %501 = vmatpush1.msra.mxu0 0.0
    %502 = vmatprep.subr.mxu0 0.0
    %503 = vmatpush1.msra.mxu0 0.0
    %504 = vmatprep.subr.mxu0 0.0
    %505 = vmatpush1.msra.mxu0 0.0
    %506 = vmatprep.subr.mxu0 0.0
    %507 = vmatpush1.msra.mxu0 0.0
    %508 = vmatprep.subr.mxu0 0.0
    %509 = vmatpush1.msra.mxu0 0.0
    %510 = vmatprep.subr.mxu0 0.0
    %511 = vmatpush1.msra.mxu0 0.0
    %512 = vmatprep.mubr.f32.mxu0 0.0
    %513 = vmatmul.mubr.f32.gmra.mrb[0].mxu0 %v446
    %v514 = vpop.f32.mrb[0].mxu0
    %v515 = vadd.f32 0.0, %v514
    %v516 = vpop.f32.mrb[0].mxu0
    %517 = vdwg.mxu0
    %v518 = vadd.f32 %v434, %v515
    %v519 = vld [vmem:[#allocation2 + $0x4] sm:$0x1]
    %v520 = vld [vmem:[#allocation2 + $0xc] sm:$0x1]
    %s521 = scalar_lea.vmem %s3, 128
    %v522 = vld [vmem:[%s521] sm:$0xff]
    %v523 = vld [vmem:[%s521 + $0x8] sm:$0xff]
    %v524 = vld [vmem:[%s521 + $0x10] sm:$0xff]
    %v525 = vld [vmem:[%s521 + $0x18] sm:$0xff]
    %v528 = vrot.slane %v520, 7
    %v529 = vsel %vm201, %v528, %v519
    %v530 = vsel %vm182, %v529, 0
    %532 = vmatprep.subr.mxu0 0.0
    %533 = vmatpush1.msra.mxu0 %v522
    %534 = vmatprep.subr.mxu0 0.0
    %535 = vmatpush1.msra.mxu0 %v523
    %536 = vmatprep.subr.mxu0 0.0
    %537 = vmatpush1.msra.mxu0 %v524
    %538 = vmatprep.subr.mxu0 0.0
    %539 = vmatpush1.msra.mxu0 %v525
    %540 = vmatprep.subr.mxu0 0.0
    %541 = vmatpush1.msra.mxu0 0.0
    %542 = vmatprep.subr.mxu0 0.0
    %543 = vmatpush1.msra.mxu0 0.0
    %544 = vmatprep.subr.mxu0 0.0
    %545 = vmatpush1.msra.mxu0 0.0
    %546 = vmatprep.subr.mxu0 0.0
    %547 = vmatpush1.msra.mxu0 0.0
    %548 = vmatprep.subr.mxu0 0.0
    %549 = vmatpush1.msra.mxu0 0.0
    %550 = vmatprep.subr.mxu0 0.0
    %551 = vmatpush1.msra.mxu0 0.0
    %552 = vmatprep.subr.mxu0 0.0
    %553 = vmatpush1.msra.mxu0 0.0
    %554 = vmatprep.subr.mxu0 0.0
    %555 = vmatpush1.msra.mxu0 0.0
    %556 = vmatprep.subr.mxu0 0.0
    %557 = vmatpush1.msra.mxu0 0.0
    %558 = vmatprep.subr.mxu0 0.0
    %559 = vmatpush1.msra.mxu0 0.0
    %560 = vmatprep.subr.mxu0 0.0
    %561 = vmatpush1.msra.mxu0 0.0
    %562 = vmatprep.subr.mxu0 0.0
    %563 = vmatpush1.msra.mxu0 0.0
    %564 = vmatprep.subr.mxu0 0.0
    %565 = vmatpush1.msra.mxu0 0.0
    %566 = vmatprep.subr.mxu0 0.0
    %567 = vmatpush1.msra.mxu0 0.0
    %568 = vmatprep.subr.mxu0 0.0
    %569 = vmatpush1.msra.mxu0 0.0
    %570 = vmatprep.subr.mxu0 0.0
    %571 = vmatpush1.msra.mxu0 0.0
    %572 = vmatprep.subr.mxu0 0.0
    %573 = vmatpush1.msra.mxu0 0.0
    %574 = vmatprep.subr.mxu0 0.0
    %575 = vmatpush1.msra.mxu0 0.0
    %576 = vmatprep.subr.mxu0 0.0
    %577 = vmatpush1.msra.mxu0 0.0
    %578 = vmatprep.subr.mxu0 0.0
    %579 = vmatpush1.msra.mxu0 0.0
    %580 = vmatprep.subr.mxu0 0.0
    %581 = vmatpush1.msra.mxu0 0.0
    %582 = vmatprep.subr.mxu0 0.0
    %583 = vmatpush1.msra.mxu0 0.0
    %584 = vmatprep.subr.mxu0 0.0
    %585 = vmatpush1.msra.mxu0 0.0
    %586 = vmatprep.subr.mxu0 0.0
    %587 = vmatpush1.msra.mxu0 0.0
    %588 = vmatprep.subr.mxu0 0.0
    %589 = vmatpush1.msra.mxu0 0.0
    %590 = vmatprep.subr.mxu0 0.0
    %591 = vmatpush1.msra.mxu0 0.0
    %592 = vmatprep.subr.mxu0 0.0
    %593 = vmatpush1.msra.mxu0 0.0
    %594 = vmatprep.subr.mxu0 0.0
    %595 = vmatpush1.msra.mxu0 0.0
    %596 = vmatprep.mubr.f32.mxu0 0.0
    %597 = vmatmul.mubr.f32.gmra.mrb[0].mxu0 %v530
    %v598 = vpop.f32.mrb[0].mxu0
    %v599 = vadd.f32 0.0, %v598
    %v600 = vpop.f32.mrb[0].mxu0
    %601 = vdwg.mxu0
    %v602 = vadd.f32 %v518, %v599
    %v603 = vld [vmem:[#allocation2 + $0x5] sm:$0x1]
    %v604 = vld [vmem:[#allocation2 + $0xd] sm:$0x1]
    %s605 = scalar_lea.vmem %s3, 160
    %v606 = vld [vmem:[%s605] sm:$0xff]
    %v607 = vld [vmem:[%s605 + $0x8] sm:$0xff]
    %v608 = vld [vmem:[%s605 + $0x10] sm:$0xff]
    %v609 = vld [vmem:[%s605 + $0x18] sm:$0xff]
    %v612 = vrot.slane %v604, 7
    %v613 = vsel %vm201, %v612, %v603
    %v614 = vsel %vm182, %v613, 0
    %616 = vmatprep.subr.mxu0 0.0
    %617 = vmatpush1.msra.mxu0 %v606
    %618 = vmatprep.subr.mxu0 0.0
    %619 = vmatpush1.msra.mxu0 %v607
    %620 = vmatprep.subr.mxu0 0.0
    %621 = vmatpush1.msra.mxu0 %v608
    %622 = vmatprep.subr.mxu0 0.0
    %623 = vmatpush1.msra.mxu0 %v609
    %624 = vmatprep.subr.mxu0 0.0
    %625 = vmatpush1.msra.mxu0 0.0
    %626 = vmatprep.subr.mxu0 0.0
    %627 = vmatpush1.msra.mxu0 0.0
    %628 = vmatprep.subr.mxu0 0.0
    %629 = vmatpush1.msra.mxu0 0.0
    %630 = vmatprep.subr.mxu0 0.0
    %631 = vmatpush1.msra.mxu0 0.0
    %632 = vmatprep.subr.mxu0 0.0
    %633 = vmatpush1.msra.mxu0 0.0
    %634 = vmatprep.subr.mxu0 0.0
    %635 = vmatpush1.msra.mxu0 0.0
    %636 = vmatprep.subr.mxu0 0.0
    %637 = vmatpush1.msra.mxu0 0.0
    %638 = vmatprep.subr.mxu0 0.0
    %639 = vmatpush1.msra.mxu0 0.0
    %640 = vmatprep.subr.mxu0 0.0
    %641 = vmatpush1.msra.mxu0 0.0
    %642 = vmatprep.subr.mxu0 0.0
    %643 = vmatpush1.msra.mxu0 0.0
    %644 = vmatprep.subr.mxu0 0.0
    %645 = vmatpush1.msra.mxu0 0.0
    %646 = vmatprep.subr.mxu0 0.0
    %647 = vmatpush1.msra.mxu0 0.0
    %648 = vmatprep.subr.mxu0 0.0
    %649 = vmatpush1.msra.mxu0 0.0
    %650 = vmatprep.subr.mxu0 0.0
    %651 = vmatpush1.msra.mxu0 0.0
    %652 = vmatprep.subr.mxu0 0.0
    %653 = vmatpush1.msra.mxu0 0.0
    %654 = vmatprep.subr.mxu0 0.0
    %655 = vmatpush1.msra.mxu0 0.0
    %656 = vmatprep.subr.mxu0 0.0
    %657 = vmatpush1.msra.mxu0 0.0
    %658 = vmatprep.subr.mxu0 0.0
    %659 = vmatpush1.msra.mxu0 0.0
    %660 = vmatprep.subr.mxu0 0.0
    %661 = vmatpush1.msra.mxu0 0.0
    %662 = vmatprep.subr.mxu0 0.0
    %663 = vmatpush1.msra.mxu0 0.0
    %664 = vmatprep.subr.mxu0 0.0
    %665 = vmatpush1.msra.mxu0 0.0
    %666 = vmatprep.subr.mxu0 0.0
    %667 = vmatpush1.msra.mxu0 0.0
    %668 = vmatprep.subr.mxu0 0.0
    %669 = vmatpush1.msra.mxu0 0.0
    %670 = vmatprep.subr.mxu0 0.0
    %671 = vmatpush1.msra.mxu0 0.0
    %672 = vmatprep.subr.mxu0 0.0
    %673 = vmatpush1.msra.mxu0 0.0
    %674 = vmatprep.subr.mxu0 0.0
    %675 = vmatpush1.msra.mxu0 0.0
    %676 = vmatprep.subr.mxu0 0.0
    %677 = vmatpush1.msra.mxu0 0.0
    %678 = vmatprep.subr.mxu0 0.0
    %679 = vmatpush1.msra.mxu0 0.0
    %680 = vmatprep.mubr.f32.mxu0 0.0
    %681 = vmatmul.mubr.f32.gmra.mrb[0].mxu0 %v614
    %v682 = vpop.f32.mrb[0].mxu0
    %v683 = vadd.f32 0.0, %v682
    %v684 = vpop.f32.mrb[0].mxu0
    %685 = vdwg.mxu0
    %v686 = vadd.f32 %v602, %v683
    %v687 = vld [vmem:[#allocation2 + $0x6] sm:$0x1]
    %v688 = vld [vmem:[#allocation2 + $0xe] sm:$0x1]
    %s689 = scalar_lea.vmem %s3, 192
    %v690 = vld [vmem:[%s689] sm:$0xff]
    %v691 = vld [vmem:[%s689 + $0x8] sm:$0xff]
    %v692 = vld [vmem:[%s689 + $0x10] sm:$0xff]
    %v693 = vld [vmem:[%s689 + $0x18] sm:$0xff]
    %v696 = vrot.slane %v688, 7
    %v697 = vsel %vm201, %v696, %v687
    %v698 = vsel %vm182, %v697, 0
    %700 = vmatprep.subr.mxu0 0.0
    %701 = vmatpush1.msra.mxu0 %v690
    %702 = vmatprep.subr.mxu0 0.0
    %703 = vmatpush1.msra.mxu0 %v691
    %704 = vmatprep.subr.mxu0 0.0
    %705 = vmatpush1.msra.mxu0 %v692
    %706 = vmatprep.subr.mxu0 0.0
    %707 = vmatpush1.msra.mxu0 %v693
    %708 = vmatprep.subr.mxu0 0.0
    %709 = vmatpush1.msra.mxu0 0.0
    %710 = vmatprep.subr.mxu0 0.0
    %711 = vmatpush1.msra.mxu0 0.0
    %712 = vmatprep.subr.mxu0 0.0
    %713 = vmatpush1.msra.mxu0 0.0
    %714 = vmatprep.subr.mxu0 0.0
    %715 = vmatpush1.msra.mxu0 0.0
    %716 = vmatprep.subr.mxu0 0.0
    %717 = vmatpush1.msra.mxu0 0.0
    %718 = vmatprep.subr.mxu0 0.0
    %719 = vmatpush1.msra.mxu0 0.0
    %720 = vmatprep.subr.mxu0 0.0
    %721 = vmatpush1.msra.mxu0 0.0
    %722 = vmatprep.subr.mxu0 0.0
    %723 = vmatpush1.msra.mxu0 0.0
    %724 = vmatprep.subr.mxu0 0.0
    %725 = vmatpush1.msra.mxu0 0.0
    %726 = vmatprep.subr.mxu0 0.0
    %727 = vmatpush1.msra.mxu0 0.0
    %728 = vmatprep.subr.mxu0 0.0
    %729 = vmatpush1.msra.mxu0 0.0
    %730 = vmatprep.subr.mxu0 0.0
    %731 = vmatpush1.msra.mxu0 0.0
    %732 = vmatprep.subr.mxu0 0.0
    %733 = vmatpush1.msra.mxu0 0.0
    %734 = vmatprep.subr.mxu0 0.0
    %735 = vmatpush1.msra.mxu0 0.0
    %736 = vmatprep.subr.mxu0 0.0
    %737 = vmatpush1.msra.mxu0 0.0
    %738 = vmatprep.subr.mxu0 0.0
    %739 = vmatpush1.msra.mxu0 0.0
    %740 = vmatprep.subr.mxu0 0.0
    %741 = vmatpush1.msra.mxu0 0.0
    %742 = vmatprep.subr.mxu0 0.0
    %743 = vmatpush1.msra.mxu0 0.0
    %744 = vmatprep.subr.mxu0 0.0
    %745 = vmatpush1.msra.mxu0 0.0
    %746 = vmatprep.subr.mxu0 0.0
    %747 = vmatpush1.msra.mxu0 0.0
    %748 = vmatprep.subr.mxu0 0.0
    %749 = vmatpush1.msra.mxu0 0.0
    %750 = vmatprep.subr.mxu0 0.0
    %751 = vmatpush1.msra.mxu0 0.0
    %752 = vmatprep.subr.mxu0 0.0
    %753 = vmatpush1.msra.mxu0 0.0
    %754 = vmatprep.subr.mxu0 0.0
    %755 = vmatpush1.msra.mxu0 0.0
    %756 = vmatprep.subr.mxu0 0.0
    %757 = vmatpush1.msra.mxu0 0.0
    %758 = vmatprep.subr.mxu0 0.0
    %759 = vmatpush1.msra.mxu0 0.0
    %760 = vmatprep.subr.mxu0 0.0
    %761 = vmatpush1.msra.mxu0 0.0
    %762 = vmatprep.subr.mxu0 0.0
    %763 = vmatpush1.msra.mxu0 0.0
    %764 = vmatprep.mubr.f32.mxu0 0.0
    %765 = vmatmul.mubr.f32.gmra.mrb[0].mxu0 %v698
    %v766 = vpop.f32.mrb[0].mxu0
    %v767 = vadd.f32 0.0, %v766
    %v768 = vpop.f32.mrb[0].mxu0
    %769 = vdwg.mxu0
    %v770 = vadd.f32 %v686, %v767
    %v771 = vld [vmem:[#allocation2 + $0x7] sm:$0x1]
    %v772 = vld [vmem:[#allocation2 + $0xf] sm:$0x1]
    %s773 = scalar_lea.vmem %s3, 224
    %v774 = vld [vmem:[%s773] sm:$0xff]
    %v775 = vld [vmem:[%s773 + $0x8] sm:$0xff]
    %v776 = vld [vmem:[%s773 + $0x10] sm:$0xff]
    %v777 = vld [vmem:[%s773 + $0x18] sm:$0xff]
    %v780 = vrot.slane %v772, 7
    %v781 = vsel %vm201, %v780, %v771
    %v782 = vsel %vm182, %v781, 0
    %784 = vmatprep.subr.mxu0 0.0
    %785 = vmatpush1.msra.mxu0 %v774
    %786 = vmatprep.subr.mxu0 0.0
    %787 = vmatpush1.msra.mxu0 %v775
    %788 = vmatprep.subr.mxu0 0.0
    %789 = vmatpush1.msra.mxu0 %v776
    %790 = vmatprep.subr.mxu0 0.0
    %791 = vmatpush1.msra.mxu0 %v777
    %792 = vmatprep.subr.mxu0 0.0
    %793 = vmatpush1.msra.mxu0 0.0
    %794 = vmatprep.subr.mxu0 0.0
    %795 = vmatpush1.msra.mxu0 0.0
    %796 = vmatprep.subr.mxu0 0.0
    %797 = vmatpush1.msra.mxu0 0.0
    %798 = vmatprep.subr.mxu0 0.0
    %799 = vmatpush1.msra.mxu0 0.0
    %800 = vmatprep.subr.mxu0 0.0
    %801 = vmatpush1.msra.mxu0 0.0
    %802 = vmatprep.subr.mxu0 0.0
    %803 = vmatpush1.msra.mxu0 0.0
    %804 = vmatprep.subr.mxu0 0.0
    %805 = vmatpush1.msra.mxu0 0.0
    %806 = vmatprep.subr.mxu0 0.0
    %807 = vmatpush1.msra.mxu0 0.0
    %808 = vmatprep.subr.mxu0 0.0
    %809 = vmatpush1.msra.mxu0 0.0
    %810 = vmatprep.subr.mxu0 0.0
    %811 = vmatpush1.msra.mxu0 0.0
    %812 = vmatprep.subr.mxu0 0.0
    %813 = vmatpush1.msra.mxu0 0.0
    %814 = vmatprep.subr.mxu0 0.0
    %815 = vmatpush1.msra.mxu0 0.0
    %816 = vmatprep.subr.mxu0 0.0
    %817 = vmatpush1.msra.mxu0 0.0
    %818 = vmatprep.subr.mxu0 0.0
    %819 = vmatpush1.msra.mxu0 0.0
    %820 = vmatprep.subr.mxu0 0.0
    %821 = vmatpush1.msra.mxu0 0.0
    %822 = vmatprep.subr.mxu0 0.0
    %823 = vmatpush1.msra.mxu0 0.0
    %824 = vmatprep.subr.mxu0 0.0
    %825 = vmatpush1.msra.mxu0 0.0
    %826 = vmatprep.subr.mxu0 0.0
    %827 = vmatpush1.msra.mxu0 0.0
    %828 = vmatprep.subr.mxu0 0.0
    %829 = vmatpush1.msra.mxu0 0.0
    %830 = vmatprep.subr.mxu0 0.0
    %831 = vmatpush1.msra.mxu0 0.0
    %832 = vmatprep.subr.mxu0 0.0
    %833 = vmatpush1.msra.mxu0 0.0
    %834 = vmatprep.subr.mxu0 0.0
    %835 = vmatpush1.msra.mxu0 0.0
    %836 = vmatprep.subr.mxu0 0.0
    %837 = vmatpush1.msra.mxu0 0.0
    %838 = vmatprep.subr.mxu0 0.0
    %839 = vmatpush1.msra.mxu0 0.0
    %840 = vmatprep.subr.mxu0 0.0
    %841 = vmatpush1.msra.mxu0 0.0
    %842 = vmatprep.subr.mxu0 0.0
    %843 = vmatpush1.msra.mxu0 0.0
    %844 = vmatprep.subr.mxu0 0.0
    %845 = vmatpush1.msra.mxu0 0.0
    %846 = vmatprep.subr.mxu0 0.0
    %847 = vmatpush1.msra.mxu0 0.0
    %848 = vmatprep.mubr.f32.mxu0 0.0
    %849 = vmatmul.mubr.f32.gmra.mrb[0].mxu0 %v782
    %v850 = vpop.f32.mrb[0].mxu0
    %v851 = vadd.f32 0.0, %v850
    %v852 = vpop.f32.mrb[0].mxu0
    %853 = vdwg.mxu0
    %v854 = vadd.f32 %v770, %v851
    %v855 = vld [vmem:[%s4] sm:$0x1]
    %v857 = vlaneseq
    %v858 = vshrl.u32 %v857, 7
    %v859 = vsub.s32 0, %v858
    %v860 = vrot.slane %v855, %v859
    %v862 = vadd.f32 %v854, %v860
    %v863 = vmax.f32 %v862, 0.0
    %v864 = vld [vmem:[%s5] sm:$0xff]
    %v865 = vld [vmem:[%s6] sm:$0x1]
    %v867 = vlaneseq
    %v868 = vshrl.u32 %v867, 7
    %v869 = vsub.s32 0, %v868
    %v870 = vrot.slane %v865, %v869
    %v873 = vsel %vm36, %v863, 0
    %875 = vmatprep.subr.mxu0 0.0
    %876 = vmatpush1.msra.mxu0 %v864
    %877 = vmatprep.subr.mxu0 0.0
    %878 = vmatpush1.msra.mxu0 0.0
    %879 = vmatprep.subr.mxu0 0.0
    %880 = vmatpush1.msra.mxu0 0.0
    %881 = vmatprep.subr.mxu0 0.0
    %882 = vmatpush1.msra.mxu0 0.0
    %883 = vmatprep.subr.mxu0 0.0
    %884 = vmatpush1.msra.mxu0 0.0
    %885 = vmatprep.subr.mxu0 0.0
    %886 = vmatpush1.msra.mxu0 0.0
    %887 = vmatprep.subr.mxu0 0.0
    %888 = vmatpush1.msra.mxu0 0.0
    %889 = vmatprep.subr.mxu0 0.0
    %890 = vmatpush1.msra.mxu0 0.0
    %891 = vmatprep.subr.mxu0 0.0
    %892 = vmatpush1.msra.mxu0 0.0
    %893 = vmatprep.subr.mxu0 0.0
    %894 = vmatpush1.msra.mxu0 0.0
    %895 = vmatprep.subr.mxu0 0.0
    %896 = vmatpush1.msra.mxu0 0.0
    %897 = vmatprep.subr.mxu0 0.0
    %898 = vmatpush1.msra.mxu0 0.0
    %899 = vmatprep.subr.mxu0 0.0
    %900 = vmatpush1.msra.mxu0 0.0
    %901 = vmatprep.subr.mxu0 0.0
    %902 = vmatpush1.msra.mxu0 0.0
    %903 = vmatprep.subr.mxu0 0.0
    %904 = vmatpush1.msra.mxu0 0.0
    %905 = vmatprep.subr.mxu0 0.0
    %906 = vmatpush1.msra.mxu0 0.0
    %907 = vmatprep.subr.mxu0 0.0
    %908 = vmatpush1.msra.mxu0 0.0
    %909 = vmatprep.subr.mxu0 0.0
    %910 = vmatpush1.msra.mxu0 0.0
    %911 = vmatprep.subr.mxu0 0.0
    %912 = vmatpush1.msra.mxu0 0.0
    %913 = vmatprep.subr.mxu0 0.0
    %914 = vmatpush1.msra.mxu0 0.0
    %915 = vmatprep.subr.mxu0 0.0
    %916 = vmatpush1.msra.mxu0 0.0
    %917 = vmatprep.subr.mxu0 0.0
    %918 = vmatpush1.msra.mxu0 0.0
    %919 = vmatprep.subr.mxu0 0.0
    %920 = vmatpush1.msra.mxu0 0.0
    %921 = vmatprep.subr.mxu0 0.0
    %922 = vmatpush1.msra.mxu0 0.0
    %923 = vmatprep.subr.mxu0 0.0
    %924 = vmatpush1.msra.mxu0 0.0
    %925 = vmatprep.subr.mxu0 0.0
    %926 = vmatpush1.msra.mxu0 0.0
    %927 = vmatprep.subr.mxu0 0.0
    %928 = vmatpush1.msra.mxu0 0.0
    %929 = vmatprep.subr.mxu0 0.0
    %930 = vmatpush1.msra.mxu0 0.0
    %931 = vmatprep.subr.mxu0 0.0
    %932 = vmatpush1.msra.mxu0 0.0
    %933 = vmatprep.subr.mxu0 0.0
    %934 = vmatpush1.msra.mxu0 0.0
    %935 = vmatprep.subr.mxu0 0.0
    %936 = vmatpush1.msra.mxu0 0.0
    %937 = vmatprep.subr.mxu0 0.0
    %938 = vmatpush1.msra.mxu0 0.0
    %939 = vmatprep.mubr.f32.mxu0 0.0
    %940 = vmatmul.mubr.f32.gmra.mrb[0].mxu0 %v873
    %v941 = vpop.f32.mrb[0].mxu0
    %v942 = vadd.f32 %v870, %v941
    %v943 = vpop.f32.mrb[0].mxu0
    %944 = vdwg.mxu0
    %vm945 = vcmask 254976
    %946 = vst.msk [vmem:[#allocation3] sm:$0x3] %vm945, %v942
    // Predicated region
    $region30: #{tpu_custom_call.1} parent=1 // pred_check
      _
    $region31: #{tpu_custom_call.1} parent=1 // pred_check_branch
      %948 = sbr.rel (0) target = $region33
    $region32: #{tpu_custom_call.1} parent=1 // pred_region
      %s950 = ssub.s32 32, 32
      %951 = vsyncadd [#allocation4], %s950
      %s953 = sshll.u32 [#allocation3], 4
      %s954 = int_to_ptr.vmem [resolvable:$true] %s953
      %956 = dma.vmem_to_hbm [thread:$0]  %s954, 32, %s7, [#allocation4]
    $region33: #{tpu_custom_call.1} parent=1 // pred_fallthru
      _
    // Predicated region
    $region34: #{tpu_custom_call.1} parent=1 // pred_check
      _
    $region35: #{tpu_custom_call.1} parent=1 // pred_check_branch
      %958 = sbr.rel (0) target = $region37
    $region36: #{tpu_custom_call.1} parent=1 // pred_region
      %959 = dma.done [#allocation4], 32
    $region37: #{tpu_custom_call.1} parent=1 // pred_fallthru
      _
    %960 = vsyncpa [#allocation4], 1

</llo_original>
